<compile_context>
chip_gen: v6e
topology: v6e:2x2x1
jax: 0.10.0
libtpu: 0.0.40
codegen_flags: <defaults>
</compile_context>

<pallas_src>
import functools
import math

import jax
import jax.numpy as jnp
from jax.experimental import pallas as pl
from jax.experimental.pallas import tpu as pltpu


def _cdiv(a, b):
    return -(-a // b)


def _round_up(a, b):
    return _cdiv(a, b) * b


def _sublane_granularity(dtype):
    return {4: 8, 2: 16, 1: 32}.get(jnp.dtype(dtype).itemsize, 8)


def _robust_loss_kernel(*refs, epsilon, inv_norm, mask_mode, group,
                        rows_full, rem_nodes, needs_bounds):
    """One grid step over a (TR, C) slab of the flattened inputs.

    A "node" is `group` (= D, the last axis of the original tensors)
    consecutive lanes of a row.  Intended for small displacement dims
    (D = 2 or 3); the D-reduction loop unrolls.
    """
    if mask_mode == "none":
        d1_ref, d2_ref, o_ref = refs
        m_ref = e_ref = None
    elif mask_mode == "full":
        d1_ref, d2_ref, m_ref, o_ref = refs
        e_ref = None
    else:  # "node": per-node mask slab + constant 0/1 expansion matrix
        d1_ref, d2_ref, m_ref, e_ref, o_ref = refs

    block_rows, lane_width = d1_ref.shape

    x = d1_ref[...].astype(jnp.float32) - d2_ref[...].astype(jnp.float32)
    if inv_norm is not None:
        x = x * jnp.float32(inv_norm)
    y = x * x
    if mask_mode == "full":
        y = y * m_ref[...].astype(jnp.float32)

    # Per-node squared norm: acc[:, c] = sum_{k < group} y[:, c + k]
    # (valid at node-start lanes c % group == 0; the roll wrap-around only
    # lands on lanes that are discarded below).
    acc = y
    for k in range(1, group):
        acc = acc + pltpu.roll(y, shift=(lane_width - k) % lane_width, axis=1)

    if mask_mode == "node":
        # Expand the (TR, C // group) per-node mask onto node-start lanes of a
        # (TR, C) tile with one small MXU matmul against a constant 0/1
        # matrix; hidden under the HBM-bound DMA on every generation.
        m_exp = jnp.dot(m_ref[...], e_ref[...],
                        preferred_element_type=jnp.float32)
        acc = acc * m_exp

    phi = jnp.sqrt(acc + jnp.float32(epsilon))

    # Keep only node-start lanes of real (non-padded) nodes.
    col = jax.lax.broadcasted_iota(jnp.int32, (block_rows, lane_width), 1)
    valid = (col % group) == 0
    if needs_bounds:
        # Row/column decomposition instead of a flat element index, so there
        # is no int32 overflow even for very large inputs.
        row = jax.lax.broadcasted_iota(jnp.int32, (block_rows, lane_width), 0)
        grow = pl.program_id(0) * block_rows + row
        valid = valid & ((grow < rows_full)
                         | ((grow == rows_full) & (col < rem_nodes * group)))
    phi = jnp.where(valid, phi, 0.0)

    # Lane-dense per-block partial sums; no carried accumulator, so the grid
    # axis stays "parallel".  The wrapper finishes the (tiny) reduction.
    o_ref[0] = jnp.sum(phi, axis=0, keepdims=True)


def robust_loss(d1, d2, mask=None, *, epsilon=1e-5, norm=None,
                lane_target=1024, row_target=None):
    """Pallas TPU implementation of RobustLoss.forward.

    d1, d2: [B, N, D] (any leading dims; the node reduction is over the last
            axis).  mask: None, full shape (== d1.shape), or per-node
            (d1.shape[:-1] or d1.shape[:-1] + (1,)).
    Returns a scalar float32 loss.
    """
    assert d1.shape == d2.shape, "d1 and d2 must have the same shape"
    if jnp.dtype(d1.dtype).itemsize > 4:
        d1 = d1.astype(jnp.float32)
    if jnp.dtype(d2.dtype).itemsize > 4:
        d2 = d2.astype(jnp.float32)

    B = int(d1.shape[0])
    D = int(d1.shape[-1])
    M = int(math.prod(d1.shape))
    Nn = M // D                                  # number of nodes
    assert Nn * D == M

    # ---- classify the mask --------------------------------------------------
    # NOTE: the reference PyTorch code calls torch.ones_like(mask) on a None
    # mask (a latent bug); the intended all-ones semantics is obtained here by
    # simply skipping the multiply -- no ones tensor is ever streamed.
    mask_mode = "none"
    if mask is not None:
        if tuple(mask.shape) == tuple(d1.shape):
            mask_mode = "full"
        elif D > 1 and tuple(mask.shape) in (tuple(d1.shape[:-1]),
                                             tuple(d1.shape[:-1]) + (1,)):
            mask_mode = "node"
        else:
            # TODO(synk): rare broadcastable mask shapes are materialized to
            # full size (one extra HBM pass); common shapes avoid this.
            mask = jnp.broadcast_to(mask, d1.shape)
            mask_mode = "full"

    # ---- choose the lane-dense 2-D view [R, C] of the flattened data --------
    base = (128 * D) // math.gcd(128, D)         # lcm(128, D): whole nodes/row
    kmax = max(1, lane_target // base)
    C = None
    for k in range(kmax, 0, -1):                 # widest row width dividing M
        if M % (k * base) == 0:
            C = k * base
            break
    if C is None:
        # TODO(synk): fallback pads with jnp.pad (one extra HBM pass per
        # input); only taken when M is not divisible by lcm(128, D).
        C = base
    Cn = C // D
    R = _cdiv(M, C)
    M_slab = R * C                               # == M on the (main) no-pad path
    Nn_slab = R * Cn

    def _to_slab(a):
        flat = a.reshape(-1)
        if M_slab != M:
            flat = jnp.pad(flat, (0, M_slab - M))
        return flat.reshape(R, C)

    inputs = [_to_slab(d1), _to_slab(d2)]

    item = max(jnp.dtype(d1.dtype).itemsize, jnp.dtype(d2.dtype).itemsize)
    sub = max(_sublane_granularity(d1.dtype), _sublane_granularity(d2.dtype))

    if mask_mode == "full":
        mdt = jnp.dtype(mask.dtype)
        if mdt == jnp.bool_ or jnp.issubdtype(mdt, jnp.integer):
            mask = mask.astype(jnp.bfloat16)
        elif jnp.dtype(mask.dtype).itemsize > 4:
            mask = mask.astype(jnp.float32)
        inputs.append(_to_slab(mask))
        item = max(item, jnp.dtype(mask.dtype).itemsize)
        sub = max(sub, _sublane_granularity(mask.dtype))
    elif mask_mode == "node":
        # Per-node ("dummy node") mask streamed at 1/D of the element traffic.
        # bf16 is exact for 0/1 dummy masks; pass a full-shape mask if exact
        # arbitrary float mask values are required.
        m_flat = mask.reshape(-1).astype(jnp.bfloat16)
        if Nn_slab != Nn:
            m_flat = jnp.pad(m_flat, (0, Nn_slab - Nn))
        inputs.append(m_flat.reshape(R, Cn))
        sub = max(sub, _sublane_granularity(jnp.bfloat16))

    # ---- row-block size / grid ----------------------------------------------
    max_tile_bytes = 4 * 1024 * 1024             # per input per buffer
    row_cap = max(sub, (max_tile_bytes // (C * item)) // sub * sub)
    if R <= sub:
        TR = R                                   # full-extent rows block
    else:
        TR = row_cap if row_target is None else min(int(row_target), row_cap)
        # Keep both v7x TensorCores busy: at least 2 grid steps.
        TR = min(TR, _round_up(_cdiv(R, 2), sub))
        TR = max(sub, (TR // sub) * sub)
    grid = _cdiv(R, TR)

    needs_bounds = (grid * TR * Cn) != Nn
    rows_full = Nn // Cn
    rem_nodes = Nn % Cn

    x_spec = pl.BlockSpec((TR, C), lambda g: (g, 0))
    in_specs = [x_spec, x_spec]
    if mask_mode == "full":
        in_specs.append(x_spec)
    elif mask_mode == "node":
        in_specs.append(pl.BlockSpec((TR, Cn), lambda g: (g, 0)))
        # Constant 0/1 expansion matrix (node j -> lane j*D), loaded once.
        e_mat = (jnp.arange(C, dtype=jnp.int32)[None, :]
                 == (jnp.arange(Cn, dtype=jnp.int32) * D)[:, None]
                 ).astype(jnp.bfloat16)
        inputs.append(e_mat)
        in_specs.append(pl.BlockSpec((Cn, C), lambda g: (0, 0)))

    kernel = functools.partial(
        _robust_loss_kernel,
        epsilon=float(epsilon),
        inv_norm=(None if norm is None else 1.0 / float(norm)),
        mask_mode=mask_mode,
        group=D,
        rows_full=rows_full,
        rem_nodes=rem_nodes,
        needs_bounds=needs_bounds,
    )

    bytes_accessed = sum(int(a.size) * jnp.dtype(a.dtype).itemsize
                         for a in inputs) + grid * C * 4
    cost = pl.CostEstimate(flops=5 * M, transcendentals=Nn,
                           bytes_accessed=bytes_accessed)

    partials = pl.pallas_call(
        kernel,
        out_shape=jax.ShapeDtypeStruct((grid, 1, C), jnp.float32),
        grid_spec=pltpu.PrefetchScalarGridSpec(
            num_scalar_prefetch=0,
            grid=(grid,),
            in_specs=in_specs,
            out_specs=pl.BlockSpec((1, 1, C), lambda g: (g, 0, 0)),
        ),
        compiler_params=pltpu.CompilerParams(
            dimension_semantics=("parallel",),
            vmem_limit_bytes=40 * 1024 * 1024,
        ),
        cost_estimate=cost,
    )(*inputs)

    return jnp.sum(partials) / jnp.float32(B)


def robust_loss_ref(d1, d2, mask=None, *, epsilon=1e-5, norm=None):
    """Pure-JAX reference mirroring the PyTorch forward (intended semantics)."""
    x = d1 - d2
    if norm is not None:
        x = x / norm
    if mask is None:
        mask = jnp.ones_like(d1)
    elif mask.ndim == d1.ndim - 1:
        mask = mask[..., None]
    xtx = jnp.sum(x * x * mask, axis=-1)
    phi = jnp.sqrt(xtx + epsilon)
    return jnp.sum(phi) / d1.shape[0]


if __name__ == "__main__":
    def run_case(key, shape, mask_kind, norm):
        k1, k2, k3 = jax.random.split(key, 3)
        d1 = jax.random.normal(k1, shape, dtype=jnp.float32)
        d2 = jax.random.normal(k2, shape, dtype=jnp.float32)
        mask = None
        if mask_kind == "node":      # dummy-node mask, per-node shape [..., 1]
            mask = (jax.random.uniform(k3, shape[:-1] + (1,)) > 0.2
                    ).astype(jnp.float32)
        elif mask_kind == "full":    # full element-wise mask
            m = (jax.random.uniform(k3, shape[:-1] + (1,)) > 0.2
                 ).astype(jnp.float32)
            mask = jnp.broadcast_to(m, shape)
        out = jax.block_until_ready(
            robust_loss(d1, d2, mask, epsilon=1e-5, norm=norm))
        ref = robust_loss_ref(d1, d2, mask, epsilon=1e-5, norm=norm)
        assert jnp.allclose(out, ref, rtol=1e-4, atol=1e-5), \
            (mask_kind, shape, out, ref)

    keys = jax.random.split(jax.random.PRNGKey(0), 7)
    run_case(keys[0], (2, 16, 2), "node", None)   # tiny (padded slab), node mask
    run_case(keys[1], (2, 16, 2), "full", 2.0)    # full-shape mask + norm
    run_case(keys[2], (2, 16, 2), None, 2.0)      # unmasked + norm
    run_case(keys[3], (4, 4096, 2), "node", None)  # no-pad path, grid >= 2
    run_case(keys[4], (4, 4096, 2), None, None)    # no-pad, unmasked
    run_case(keys[5], (2, 10, 3), "node", None)    # D = 3 (two lane rolls)
    run_case(keys[6], (5, 4096, 2), "node", None)  # partial trailing row-block
    print("KERNEL_OK")
</pallas_src>

<mosaic_0001>
module attributes {stable_mosaic.version = 11 : i64} {
  func.func @_robust_loss_kernel(%arg0: i32, %arg1: memref<1x128xf32, #tpu.memory_space<vmem>>, %arg2: memref<1x128xf32, #tpu.memory_space<vmem>>, %arg3: memref<1x64xbf16, #tpu.memory_space<vmem>>, %arg4: memref<64x128xbf16, #tpu.memory_space<vmem>>, %arg5: memref<1x1x128xf32, #tpu.memory_space<vmem>>) attributes {dimension_semantics = [#tpu.dimension_semantics<parallel>], iteration_bounds = array<i64: 1>, scalar_prefetch = 0 : i64, scratch_operands = 0 : i64, tpu.core_type = #tpu.core_type<tc>, window_params = [{transform_indices = @transform_0, window_bounds = array<i64: 1, 128>}, {transform_indices = @transform_1, window_bounds = array<i64: 1, 128>}, {transform_indices = @transform_2, window_bounds = array<i64: 1, 64>}, {pipeline_mode = #tpu.pipeline_mode<synchronous>, transform_indices = @transform_3, window_bounds = array<i64: 64, 128>}, {transform_indices = @transform_4, window_bounds = array<i64: 1, 1, 128>}]} {
    %c0 = arith.constant 0 : index
    %c0_0 = arith.constant 0 : index
    %0 = vector.load %arg1[%c0, %c0_0] : memref<1x128xf32, #tpu.memory_space<vmem>>, vector<1x128xf32>
    %c0_1 = arith.constant 0 : index
    %c0_2 = arith.constant 0 : index
    %1 = vector.load %arg2[%c0_1, %c0_2] : memref<1x128xf32, #tpu.memory_space<vmem>>, vector<1x128xf32>
    %2 = arith.subf %0, %1 : vector<1x128xf32>
    %3 = arith.mulf %2, %2 : vector<1x128xf32>
    %c127_i32 = arith.constant 127 : i32
    %4 = tpu.dynamic_rotate %3 by %c127_i32 dim 1 : vector<1x128xf32>, i32 -> vector<1x128xf32>
    %5 = arith.addf %3, %4 : vector<1x128xf32>
    %c0_3 = arith.constant 0 : index
    %c0_4 = arith.constant 0 : index
    %6 = vector.load %arg3[%c0_3, %c0_4] : memref<1x64xbf16, #tpu.memory_space<vmem>>, vector<1x64xbf16>
    %c0_5 = arith.constant 0 : index
    %c0_6 = arith.constant 0 : index
    %7 = vector.load %arg4[%c0_5, %c0_6] : memref<64x128xbf16, #tpu.memory_space<vmem>>, vector<64x128xbf16>
    %cst = arith.constant dense<0.000000e+00> : vector<1x128xf32>
    %8 = tpu.matmul %6, %7, %cst {dimension_numbers = #tpu.dot_dimension_numbers<[1], [0], [0], [1], [0, 0, 1, 1], [], []>} : vector<1x64xbf16>, vector<64x128xbf16>, vector<1x128xf32> -> vector<1x128xf32>
    %9 = arith.mulf %5, %8 : vector<1x128xf32>
    %cst_7 = arith.constant 9.99999974E-6 : f32
    %10 = vector.broadcast %cst_7 : f32 to vector<1x128xf32>
    %11 = arith.addf %9, %10 : vector<1x128xf32>
    %12 = math.sqrt %11 : vector<1x128xf32>
    %13 = tpu.iota {dimensions = array<i32: 1>} : vector<1x128xi32>
    %c2_i32 = arith.constant 2 : i32
    %c0_i32 = arith.constant 0 : i32
    %14 = arith.cmpi eq, %c2_i32, %c0_i32 : i32
    %c1_i32 = arith.constant 1 : i32
    %15 = arith.select %14, %c1_i32, %c2_i32 : i32
    %16 = vector.broadcast %15 : i32 to vector<1x128xi32>
    %17 = arith.remsi %13, %16 : vector<1x128xi32>
    %c0_i32_8 = arith.constant 0 : i32
    %18 = vector.broadcast %c0_i32_8 : i32 to vector<1x128xi32>
    %19 = arith.cmpi ne, %17, %18 : vector<1x128xi32>
    %c0_i32_9 = arith.constant 0 : i32
    %20 = vector.broadcast %c0_i32_9 : i32 to vector<1x128xi32>
    %21 = arith.cmpi slt, %17, %20 : vector<1x128xi32>
    %c0_i32_10 = arith.constant 0 : i32
    %22 = arith.cmpi slt, %15, %c0_i32_10 : i32
    %23 = vector.broadcast %22 : i1 to vector<1x128xi1>
    %24 = vector.broadcast %23 : vector<1x128xi1> to vector<1x128xi1>
    %25 = arith.xori %21, %24 : vector<1x128xi1>
    %26 = arith.andi %25, %19 : vector<1x128xi1>
    %27 = vector.broadcast %15 : i32 to vector<1x128xi32>
    %28 = arith.addi %17, %27 : vector<1x128xi32>
    %29 = arith.select %26, %28, %17 : vector<1x128xi1>, vector<1x128xi32>
    %c0_i32_11 = arith.constant 0 : i32
    %30 = vector.broadcast %c0_i32_11 : i32 to vector<1x128xi32>
    %31 = arith.cmpi eq, %29, %30 : vector<1x128xi32>
    %32 = tpu.iota {dimensions = array<i32: 0>} : vector<1x128xi32>
    %c1_i32_12 = arith.constant 1 : i32
    %33 = arith.muli %arg0, %c1_i32_12 : i32
    %34 = vector.broadcast %33 : i32 to vector<1x128xi32>
    %35 = arith.addi %34, %32 : vector<1x128xi32>
    %c0_i32_13 = arith.constant 0 : i32
    %36 = vector.broadcast %c0_i32_13 : i32 to vector<1x128xi32>
    %37 = arith.cmpi slt, %35, %36 : vector<1x128xi32>
    %c0_i32_14 = arith.constant 0 : i32
    %38 = vector.broadcast %c0_i32_14 : i32 to vector<1x128xi32>
    %39 = arith.cmpi eq, %35, %38 : vector<1x128xi32>
    %c64_i32 = arith.constant 64 : i32
    %40 = vector.broadcast %c64_i32 : i32 to vector<1x128xi32>
    %41 = arith.cmpi slt, %13, %40 : vector<1x128xi32>
    %42 = arith.andi %39, %41 : vector<1x128xi1>
    %43 = arith.ori %37, %42 : vector<1x128xi1>
    %44 = arith.andi %31, %43 : vector<1x128xi1>
    %cst_15 = arith.constant 0.000000e+00 : f32
    %45 = vector.broadcast %cst_15 : f32 to vector<1x128xf32>
    %46 = arith.select %44, %12, %45 : vector<1x128xi1>, vector<1x128xf32>
    %cst_16 = arith.constant dense<0.000000e+00> : vector<128xf32>
    %47 = vector.multi_reduction <add>, %46, %cst_16 [0] : vector<1x128xf32> to vector<128xf32>
    %48 = vector.shape_cast %47 : vector<128xf32> to vector<1x128xf32>
    %c0_17 = arith.constant 0 : index
    %c0_18 = arith.constant 0 : index
    %c0_19 = arith.constant 0 : index
    %49 = vector.load %arg5[%c0_17, %c0_18, %c0_19] : memref<1x1x128xf32, #tpu.memory_space<vmem>>, vector<1x1x128xf32>
    %50 = vector.shape_cast %49 : vector<1x1x128xf32> to vector<1x128xf32>
    %51 = vector.shape_cast %48 : vector<1x128xf32> to vector<1x1x128xf32>
    tpu.vector_store %arg5[%c0_17, %c0_18, %c0_19], %51 {strides = array<i32>} : memref<1x1x128xf32, #tpu.memory_space<vmem>>, vector<1x1x128xf32>,
    return
  }
  func.func @transform_0(%arg0: i32) -> (i32, i32) {
    %c0_i32 = arith.constant 0 : i32
    %c0_i32_0 = arith.constant 0 : i32
    return %arg0, %c0_i32 : i32, i32
  }
  func.func @transform_1(%arg0: i32) -> (i32, i32) {
    %c0_i32 = arith.constant 0 : i32
    %c0_i32_0 = arith.constant 0 : i32
    return %arg0, %c0_i32 : i32, i32
  }
  func.func @transform_2(%arg0: i32) -> (i32, i32) {
    %c0_i32 = arith.constant 0 : i32
    %c0_i32_0 = arith.constant 0 : i32
    return %arg0, %c0_i32 : i32, i32
  }
  func.func @transform_3(%arg0: i32) -> (i32, i32) {
    %c0_i32 = arith.constant 0 : i32
    %c0_i32_0 = arith.constant 0 : i32
    %c0_i32_1 = arith.constant 0 : i32
    return %c0_i32, %c0_i32_0 : i32, i32
  }
  func.func @transform_4(%arg0: i32) -> (i32, i32, i32) {
    %c0_i32 = arith.constant 0 : i32
    %c0_i32_0 = arith.constant 0 : i32
    %c0_i32_1 = arith.constant 0 : i32
    return %arg0, %c0_i32, %c0_i32_0 : i32, i32, i32
  }
}

</mosaic_0001>

<llo_original>
// kernel: tpu_custom_call.1
$region0: #{tpu_custom_call.1}
  #allocation0 [shape = 'u32[]', space=smem, size = 0x4, offset = 0x4, fixed_abs, tag = 'smem constant byte address 0x4 - core index']
  #allocation1 [shape = 'u32[144,128]{1,0:T(1,128)}', space=vmem, size = 0x12000, scoped, tag = 'internal scratch']
  %s0 = inlined_call_operand.hbm [shape: f32[1,128], index: 0, kind: input, shape index: {}]
  %s1 = inlined_call_operand.vmem [shape: f32[1,128], index: 1, kind: input, shape index: {}]
  %s2 = inlined_call_operand.vmem [shape: bf16[1,64], index: 2, kind: input, shape index: {}]
  %s3 = inlined_call_operand.hbm [shape: bf16[64,128], index: 3, kind: input, shape index: {}]
  %s4 = inlined_call_operand.hbm [shape: f32[1,1,128], index: 4, kind: output, shape index: {}]
  %s5 = sld [smem:[#allocation0]]
  $region34: #{tpu_custom_call.1} parent=0
    _
  %s7 = ssub.s32 1, %s5
  %s8 = scalar_select 0, %s7, %s5
  $region1: #{tpu_custom_call.1} parent=0
    #allocation2 [shape = 'u8[512]{0}', space=vmem, size = 0x400, scoped, tag = 'input window, operand 0, single buffered']
    #allocation3 [shape = 's32[1]{0}', space=sflag, size = 0x4, scoped, tag = 'scoped memory for tpu_custom_call.1']
    #allocation4 [shape = 's32[1]{0}', space=sflag, size = 0x4, scoped, tag = 'scoped memory for tpu_custom_call.1']
    #allocation5 [shape = 'u8[16384]{0}', space=vmem, size = 0x4000, scoped, tag = 'input window, operand 3, single buffered']
    #allocation6 [shape = 's32[1]{0}', space=sflag, size = 0x4, scoped, tag = 'scoped memory for tpu_custom_call.1']
    #allocation7 [shape = 'u8[512]{0}', space=vmem, size = 0x400, scoped, tag = 'output window, operand 0, single buffered']
    %9 = vsyncpa [#allocation3], 0
    %10 = vsyncpa [#allocation6], 0
    %11 = vsyncpa [#allocation4], 0
    // Predicated region
    $region2: #{tpu_custom_call.1} parent=1 // pred_check
      _
    $region3: #{tpu_custom_call.1} parent=1 // pred_check_branch
      %13 = sbr.rel (0) target = $region5
    $region4: #{tpu_custom_call.1} parent=1 // pred_region
      %s15 = ssub.s32 16, 16
      %16 = vsyncadd [#allocation3], %s15
      %s18 = sshll.u32 [#allocation2], 4
      %s19 = int_to_ptr.vmem [resolvable:$true] %s18
      %21 = dma.hbm_to_vmem [thread:$0]  %s0, 16, %s19, [#allocation3]
    $region5: #{tpu_custom_call.1} parent=1 // pred_fallthru
      _
    // Predicated region
    $region6: #{tpu_custom_call.1} parent=1 // pred_check
      _
    $region7: #{tpu_custom_call.1} parent=1 // pred_check_branch
      %23 = sbr.rel (0) target = $region9
    $region8: #{tpu_custom_call.1} parent=1 // pred_region
      _
    $region9: #{tpu_custom_call.1} parent=1 // pred_fallthru
      _
    // Predicated region
    $region10: #{tpu_custom_call.1} parent=1 // pred_check
      _
    $region11: #{tpu_custom_call.1} parent=1 // pred_check_branch
      %25 = sbr.rel (0) target = $region13
    $region12: #{tpu_custom_call.1} parent=1 // pred_region
      _
    $region13: #{tpu_custom_call.1} parent=1 // pred_fallthru
      _
    // Predicated region
    $region14: #{tpu_custom_call.1} parent=1 // pred_check
      _
    $region15: #{tpu_custom_call.1} parent=1 // pred_check_branch
      %27 = sbr.rel (0) target = $region17
    $region16: #{tpu_custom_call.1} parent=1 // pred_region
      %s29 = ssub.s32 512, 512
      %30 = vsyncadd [#allocation6], %s29
      %s31 = sshll.u32 [#allocation5], 4
      %s32 = int_to_ptr.vmem [resolvable:$true] %s31
      %37 = dma.hbm_to_vmem [thread:$0]  %s3, 512, %s32, [#allocation6], 64, 64, 4
    $region17: #{tpu_custom_call.1} parent=1 // pred_fallthru
      _
    // Predicated region
    $region18: #{tpu_custom_call.1} parent=1 // pred_check
      _
    $region19: #{tpu_custom_call.1} parent=1 // pred_check_branch
      %39 = sbr.rel (0) target = $region21
    $region20: #{tpu_custom_call.1} parent=1 // pred_region
      %40 = dma.done [#allocation3], 16
    $region21: #{tpu_custom_call.1} parent=1 // pred_fallthru
      _
    // Predicated region
    $region22: #{tpu_custom_call.1} parent=1 // pred_check
      _
    $region23: #{tpu_custom_call.1} parent=1 // pred_check_branch
      %42 = sbr.rel (0) target = $region25
    $region24: #{tpu_custom_call.1} parent=1 // pred_region
      %43 = dma.done [#allocation6], 512
    $region25: #{tpu_custom_call.1} parent=1 // pred_fallthru
      _
    %v45 = vld [vmem:[#allocation2] sm:$0x1]
    %v46 = vld [vmem:[%s1] sm:$0x1]
    %v47 = vsub.f32 %v45, %v46
    %v48 = vmul.f32 %v47, %v47
    %49 = vrot.lane.b32.xlu0 %v48, 127
    %v50 = vpop.permute.xlu0 %49
    %v51 = vadd.f32 %v48, %v50
    %v52 = vld [vmem:[%s2] sm:$0x1]
    %v53 = vld [vmem:[#allocation5] sm:$0xf]
    %v54 = vld [vmem:[#allocation5 + $0x4] sm:$0xf]
    %v55 = vld [vmem:[#allocation5 + $0x8] sm:$0xf]
    %v56 = vld [vmem:[#allocation5 + $0xc] sm:$0xf]
    %v57 = vld [vmem:[#allocation5 + $0x10] sm:$0xf]
    %v58 = vld [vmem:[#allocation5 + $0x14] sm:$0xf]
    %v59 = vld [vmem:[#allocation5 + $0x18] sm:$0xf]
    %v60 = vld [vmem:[#allocation5 + $0x1c] sm:$0xf]
    %v69 = vunpack.c.l.b16 %v53
    %v70 = vunpack.c.l.b16 %v54
    %v71 = vunpack.c.l.b16 %v55
    %v72 = vunpack.c.l.b16 %v56
    %v73 = vunpack.c.l.b16 %v57
    %v74 = vunpack.c.l.b16 %v58
    %v75 = vunpack.c.l.b16 %v59
    %v76 = vunpack.c.l.b16 %v60
    %v77 = vpack.c.b16 %v70, %v69
    %v78 = vpack.c.b16 %v72, %v71
    %v79 = vpack.c.b16 %v74, %v73
    %v80 = vpack.c.b16 %v76, %v75
    %vm85 = vcmask 523264
    %v87 = vsel %vm85, %v52, 0
    %89 = vmatprep.subr.bf16.mxu0 0
    %90 = vmatpush1.bf16.msra.mxu0 0
    %91 = vmatprep.subr.bf16.mxu0 0
    %92 = vmatpush1.bf16.msra.mxu0 0
    %93 = vmatprep.subr.bf16.mxu0 0
    %94 = vmatpush1.bf16.msra.mxu0 0
    %95 = vmatprep.subr.bf16.mxu0 0
    %96 = vmatpush1.bf16.msra.mxu0 0
    %97 = vmatprep.subr.bf16.mxu0 0
    %98 = vmatpush1.bf16.msra.mxu0 %v80
    %99 = vmatprep.subr.bf16.mxu0 0
    %100 = vmatpush1.bf16.msra.mxu0 %v79
    %101 = vmatprep.subr.bf16.mxu0 0
    %102 = vmatpush1.bf16.msra.mxu0 %v78
    %103 = vmatprep.subr.bf16.mxu0 0
    %104 = vmatpush1.bf16.msra.mxu0 %v77
    %105 = vmatprep.subr.bf16.mxu0 0
    %106 = vmatpush2.bf16.msra.mxu0 0
    %107 = vmatprep.subr.bf16.mxu0 0
    %108 = vmatpush2.bf16.msra.mxu0 0
    %109 = vmatprep.subr.bf16.mxu0 0
    %110 = vmatpush2.bf16.msra.mxu0 0
    %111 = vmatprep.subr.bf16.mxu0 0
    %112 = vmatpush2.bf16.msra.mxu0 0
    %113 = vmatprep.subr.bf16.mxu0 0
    %114 = vmatpush2.bf16.msra.mxu0 0
    %115 = vmatprep.subr.bf16.mxu0 0
    %116 = vmatpush2.bf16.msra.mxu0 0
    %117 = vmatprep.subr.bf16.mxu0 0
    %118 = vmatpush2.bf16.msra.mxu0 0
    %119 = vmatprep.subr.bf16.mxu0 0
    %120 = vmatpush2.bf16.msra.mxu0 0
    %121 = vmatprep.mubr.bf16.mxu0 0
    %122 = vmatmul.mubr.bf16.gmra.mxu0 %v87
    %v123 = vpop.f32.mrf.mxu0
    %v124 = vadd.f32 0.0, %v123
    %v125 = vpop.f32.mrf.mxu0
    %v126 = vpop.f32.mrf.mxu0
    %v127 = vpop.f32.mrf.mxu0
    %128 = vdwg.mxu0
    %v129 = vmul.f32 %v51, %v124
    %v130 = vadd.f32 %v129, 1e-05
    %v131 = vrsqrt.pop %v130
    %v132 = vmul.f32 %v130, %v131
    %vm133 = vcmp.eq.f32.partialorder %v130, inf
    %v134 = vsel %vm133, %v130, %v132
    %vm135 = vcmp.eq.f32.partialorder %v130, 0.0
    %v136 = vand.u32 %v130, 2147483648
    %v137 = vsel %vm135, %v136, %v134
    %v138 = vlaneseq
    %v139 = vand.u32 %v138, 127
    %vm140 = vcmp.lt.s32.totalorder %v139, 0
    %v141 = vsub.s32 0, %v139
    %v142 = vsel %vm140, %v141, %v139
    %v143 = vshrl.u32 %v142, 1
    %v144 = vand.u32 %v142, 1
    %v145 = vsub.s32 0, %v144
    %v146 = vsel %vm140, %v145, %v144
    %vm147 = vcmp.ne.s32.totalorder %v146, 0
    %vm148 = vcmp.lt.s32.totalorder %v146, 0
    %vm149 = vmand %vm148, %vm147
    %v150 = vadd.s32 %v146, 2
    %v151 = vsel %vm149, %v150, %v146
    %vm152 = vcmp.eq.s32.totalorder %v151, 0
    %v153 = vlaneseq
    %v154 = vshrl.u32 %v153, 7
    %v155 = vstv 0
    %v156 = vadd.s32 %v155, %v154
    %vm157 = vcmp.lt.s32.totalorder %v156, 0
    %vm158 = vcmp.eq.s32.totalorder %v156, 0
    %vm159 = vcmp.lt.s32.totalorder %v139, 64
    %vm160 = vmand %vm158, %vm159
    %vm161 = vmor %vm157, %vm160
    %vm162 = vmand %vm152, %vm161
    %v163 = vsel %vm162, %v137, 0.0
    %v164 = vadd.f32 %v163, 0.0
    %165 = vst [vmem:[#allocation7] sm:$0x1] %v164
    // Predicated region
    $region26: #{tpu_custom_call.1} parent=1 // pred_check
      _
    $region27: #{tpu_custom_call.1} parent=1 // pred_check_branch
      %167 = sbr.rel (0) target = $region29
    $region28: #{tpu_custom_call.1} parent=1 // pred_region
      %s169 = ssub.s32 16, 16
      %170 = vsyncadd [#allocation4], %s169
      %s172 = sshll.u32 [#allocation7], 4
      %s173 = int_to_ptr.vmem [resolvable:$true] %s172
      %175 = dma.vmem_to_hbm [thread:$0]  %s173, 16, %s4, [#allocation4]
    $region29: #{tpu_custom_call.1} parent=1 // pred_fallthru
      _
    // Predicated region
    $region30: #{tpu_custom_call.1} parent=1 // pred_check
      _
    $region31: #{tpu_custom_call.1} parent=1 // pred_check_branch
      %177 = sbr.rel (0) target = $region33
    $region32: #{tpu_custom_call.1} parent=1 // pred_region
      %178 = dma.done [#allocation4], 16
    $region33: #{tpu_custom_call.1} parent=1 // pred_fallthru
      _
    %179 = vsyncpa [#allocation3], 1
    %180 = vsyncpa [#allocation6], 1
    %181 = vsyncpa [#allocation4], 1

</llo_original>
